<compile_context>
chip_gen: v6e
topology: v6e:2x2x1
jax: 0.10.0
libtpu: 0.0.40
codegen_flags: <defaults>
</compile_context>

<pallas_src>
import jax
import jax.numpy as jnp
from jax.experimental import pallas as pl
from jax.experimental.pallas import tpu as pltpu

IN_FEATURES = 14 * 28   # 392
HIDDEN = 256
OUT_FEATURES = 128
TM_MAX = 1024           # batch tile; sized for the smallest VMEM (v7x)


def _round_up(n, m):
    return ((n + m - 1) // m) * m


def _mlp_kernel(x_ref, w1_ref, b1_ref, w2_ref, b2_ref, o_ref):
    # x_ref:  (TM, 392)  bf16      w1_ref: (392, 256) bf16   b1_ref: (1, 256) f32
    # w2_ref: (256, 128) bf16      b2_ref: (1, 128)   f32    o_ref:  (TM, 128) f32
    h = jnp.dot(x_ref[...], w1_ref[...], preferred_element_type=jnp.float32)
    h = jnp.maximum(h + b1_ref[...], 0.0)                       # bias + ReLU in f32 (VPU)
    o = jnp.dot(h.astype(jnp.bfloat16), w2_ref[...],
                preferred_element_type=jnp.float32)
    o_ref[...] = (o + b2_ref[...]).astype(o_ref.dtype)


def bottom_model_for_mnist(x, w1, b1, w2, b2):
    """Forward pass of BottomModelForMnist.

    x : (N, 1, 14, 28) float array (NCHW, as in PyTorch)
    w1: (392, 256), b1: (256,), w2: (256, 128), b2: (128,)
       (weights ideally pre-cast to bfloat16 once at init)
    returns (N, 128) float32
    """
    n = x.shape[0]
    x2d = x.reshape(n, IN_FEATURES).astype(jnp.bfloat16)

    # bf16 weights (no-op cast if already bf16), f32 biases broadcast rows.
    w1b = w1.astype(jnp.bfloat16)
    w2b = w2.astype(jnp.bfloat16)
    b1_2d = b1.reshape(1, HIDDEN).astype(jnp.float32)
    b2_2d = b2.reshape(1, OUT_FEATURES).astype(jnp.float32)

    # Batch tile: multiple of 8, capped at TM_MAX; pad N up to a tile multiple.
    tm = min(TM_MAX, _round_up(n, 8))
    n_pad = _round_up(n, tm)
    if n_pad != n:
        x2d = jnp.pad(x2d, ((0, n_pad - n), (0, 0)))

    grid = (n_pad // tm,)

    out = pl.pallas_call(
        _mlp_kernel,
        out_shape=jax.ShapeDtypeStruct((n_pad, OUT_FEATURES), jnp.float32),
        grid=grid,
        in_specs=[
            pl.BlockSpec((tm, IN_FEATURES), lambda i: (i, 0)),       # x tile (pipelined)
            pl.BlockSpec((IN_FEATURES, HIDDEN), lambda i: (0, 0)),   # W1 resident
            pl.BlockSpec((1, HIDDEN), lambda i: (0, 0)),             # b1 resident
            pl.BlockSpec((HIDDEN, OUT_FEATURES), lambda i: (0, 0)),  # W2 resident
            pl.BlockSpec((1, OUT_FEATURES), lambda i: (0, 0)),       # b2 resident
        ],
        out_specs=pl.BlockSpec((tm, OUT_FEATURES), lambda i: (i, 0)),
        compiler_params=pltpu.CompilerParams(
            dimension_semantics=("parallel",),   # megacore sharding on v7x
        ),
    )(x2d, w1b, b1_2d, w2b, b2_2d)

    return out[:n] if n_pad != n else out


def init_params(key):
    """Deterministic init matching PyTorch Linear shapes (stored transposed).

    Weights are stored in bf16 once here so the per-call wrapper casts are no-ops.
    """
    k1, k2, k3, k4 = jax.random.split(key, 4)
    # nn.Linear default: U(-1/sqrt(fan_in), 1/sqrt(fan_in))
    lim1 = 1.0 / jnp.sqrt(float(IN_FEATURES))
    lim2 = 1.0 / jnp.sqrt(float(HIDDEN))
    w1 = jax.random.uniform(k1, (IN_FEATURES, HIDDEN), jnp.float32, -lim1, lim1)
    b1 = jax.random.uniform(k2, (HIDDEN,), jnp.float32, -lim1, lim1)
    w2 = jax.random.uniform(k3, (HIDDEN, OUT_FEATURES), jnp.float32, -lim2, lim2)
    b2 = jax.random.uniform(k4, (OUT_FEATURES,), jnp.float32, -lim2, lim2)
    return w1.astype(jnp.bfloat16), b1, w2.astype(jnp.bfloat16), b2


if __name__ == "__main__":
    key = jax.random.PRNGKey(0)
    kx, kp = jax.random.split(key)
    batch = 10  # not a multiple of 8 -> exercises the padding/slice path
    x = jax.random.normal(kx, (batch, 1, 14, 28), jnp.float32)  # NCHW
    w1, b1, w2, b2 = init_params(kp)

    out = bottom_model_for_mnist(x, w1, b1, w2, b2)
    out = jax.block_until_ready(out)

    # Reference in plain JAX, mirroring the kernel's bf16-input / f32-accumulate math.
    x2d = x.reshape(batch, IN_FEATURES)
    xb = x2d.astype(jnp.bfloat16).astype(jnp.float32)
    w1f = w1.astype(jnp.float32)
    w2f = w2.astype(jnp.float32)
    h = jnp.maximum(xb @ w1f + b1, 0.0)
    hb = h.astype(jnp.bfloat16).astype(jnp.float32)
    ref = hb @ w2f + b2

    assert out.shape == (batch, OUT_FEATURES)
    assert out.dtype == jnp.float32
    assert jnp.allclose(out, ref, atol=5e-3, rtol=5e-3), float(jnp.max(jnp.abs(out - ref)))

    # Sanity check vs full-f32 math (looser tolerance for bf16 inputs).
    ref_f32 = jnp.maximum(x2d @ w1f + b1, 0.0) @ w2f + b2
    assert jnp.allclose(out, ref_f32, atol=3e-2, rtol=3e-2)

    print("KERNEL_OK")
</pallas_src>

<mosaic_0001>
module attributes {stable_mosaic.version = 11 : i64} {
  func.func @_mlp_kernel(%arg0: i32, %arg1: memref<16x392xbf16, #tpu.memory_space<vmem>>, %arg2: memref<392x256xbf16, #tpu.memory_space<vmem>>, %arg3: memref<1x256xf32, #tpu.memory_space<vmem>>, %arg4: memref<256x128xbf16, #tpu.memory_space<vmem>>, %arg5: memref<1x128xf32, #tpu.memory_space<vmem>>, %arg6: memref<16x128xf32, #tpu.memory_space<vmem>>) attributes {dimension_semantics = [#tpu.dimension_semantics<parallel>], iteration_bounds = array<i64: 1>, scalar_prefetch = 0 : i64, scratch_operands = 0 : i64, tpu.core_type = #tpu.core_type<tc>, window_params = [{transform_indices = @transform_0, window_bounds = array<i64: 16, 392>}, {pipeline_mode = #tpu.pipeline_mode<synchronous>, transform_indices = @transform_1, window_bounds = array<i64: 392, 256>}, {pipeline_mode = #tpu.pipeline_mode<synchronous>, transform_indices = @transform_2, window_bounds = array<i64: 1, 256>}, {pipeline_mode = #tpu.pipeline_mode<synchronous>, transform_indices = @transform_3, window_bounds = array<i64: 256, 128>}, {pipeline_mode = #tpu.pipeline_mode<synchronous>, transform_indices = @transform_4, window_bounds = array<i64: 1, 128>}, {transform_indices = @transform_5, window_bounds = array<i64: 16, 128>}]} {
    %c0 = arith.constant 0 : index
    %c0_0 = arith.constant 0 : index
    %0 = vector.load %arg1[%c0, %c0_0] : memref<16x392xbf16, #tpu.memory_space<vmem>>, vector<16x392xbf16>
    %c0_1 = arith.constant 0 : index
    %c0_2 = arith.constant 0 : index
    %1 = vector.load %arg2[%c0_1, %c0_2] : memref<392x256xbf16, #tpu.memory_space<vmem>>, vector<392x256xbf16>
    %cst = arith.constant dense<0.000000e+00> : vector<16x256xf32>
    %2 = tpu.matmul %0, %1, %cst {dimension_numbers = #tpu.dot_dimension_numbers<[1], [0], [0], [1], [0, 0, 1, 1], [], []>} : vector<16x392xbf16>, vector<392x256xbf16>, vector<16x256xf32> -> vector<16x256xf32>
    %c0_3 = arith.constant 0 : index
    %c0_4 = arith.constant 0 : index
    %3 = vector.load %arg3[%c0_3, %c0_4] : memref<1x256xf32, #tpu.memory_space<vmem>>, vector<1x256xf32>
    %4 = vector.broadcast %3 : vector<1x256xf32> to vector<16x256xf32>
    %5 = arith.addf %2, %4 : vector<16x256xf32>
    %cst_5 = arith.constant 0.000000e+00 : f32
    %6 = vector.broadcast %cst_5 : f32 to vector<16x256xf32>
    %7 = arith.maximumf %5, %6 : vector<16x256xf32>
    %8 = arith.truncf %7 : vector<16x256xf32> to vector<16x256xbf16>
    %c0_6 = arith.constant 0 : index
    %c0_7 = arith.constant 0 : index
    %9 = vector.load %arg4[%c0_6, %c0_7] : memref<256x128xbf16, #tpu.memory_space<vmem>>, vector<256x128xbf16>
    %cst_8 = arith.constant dense<0.000000e+00> : vector<16x128xf32>
    %10 = tpu.matmul %8, %9, %cst_8 {dimension_numbers = #tpu.dot_dimension_numbers<[1], [0], [0], [1], [0, 0, 1, 1], [], []>} : vector<16x256xbf16>, vector<256x128xbf16>, vector<16x128xf32> -> vector<16x128xf32>
    %c0_9 = arith.constant 0 : index
    %c0_10 = arith.constant 0 : index
    %11 = vector.load %arg5[%c0_9, %c0_10] : memref<1x128xf32, #tpu.memory_space<vmem>>, vector<1x128xf32>
    %12 = vector.broadcast %11 : vector<1x128xf32> to vector<16x128xf32>
    %13 = arith.addf %10, %12 : vector<16x128xf32>
    %c0_11 = arith.constant 0 : index
    %c0_12 = arith.constant 0 : index
    %14 = vector.load %arg6[%c0_11, %c0_12] : memref<16x128xf32, #tpu.memory_space<vmem>>, vector<16x128xf32>
    tpu.vector_store %arg6[%c0_11, %c0_12], %13 {strides = array<i32>} : memref<16x128xf32, #tpu.memory_space<vmem>>, vector<16x128xf32>,
    return
  }
  func.func @transform_0(%arg0: i32) -> (i32, i32) {
    %c0_i32 = arith.constant 0 : i32
    %c0_i32_0 = arith.constant 0 : i32
    return %arg0, %c0_i32 : i32, i32
  }
  func.func @transform_1(%arg0: i32) -> (i32, i32) {
    %c0_i32 = arith.constant 0 : i32
    %c0_i32_0 = arith.constant 0 : i32
    %c0_i32_1 = arith.constant 0 : i32
    return %c0_i32, %c0_i32_0 : i32, i32
  }
  func.func @transform_2(%arg0: i32) -> (i32, i32) {
    %c0_i32 = arith.constant 0 : i32
    %c0_i32_0 = arith.constant 0 : i32
    %c0_i32_1 = arith.constant 0 : i32
    return %c0_i32, %c0_i32_0 : i32, i32
  }
  func.func @transform_3(%arg0: i32) -> (i32, i32) {
    %c0_i32 = arith.constant 0 : i32
    %c0_i32_0 = arith.constant 0 : i32
    %c0_i32_1 = arith.constant 0 : i32
    return %c0_i32, %c0_i32_0 : i32, i32
  }
  func.func @transform_4(%arg0: i32) -> (i32, i32) {
    %c0_i32 = arith.constant 0 : i32
    %c0_i32_0 = arith.constant 0 : i32
    %c0_i32_1 = arith.constant 0 : i32
    return %c0_i32, %c0_i32_0 : i32, i32
  }
  func.func @transform_5(%arg0: i32) -> (i32, i32) {
    %c0_i32 = arith.constant 0 : i32
    %c0_i32_0 = arith.constant 0 : i32
    return %arg0, %c0_i32 : i32, i32
  }
}

</mosaic_0001>

<llo_original>
// kernel: tpu_custom_call.1
$region0: #{tpu_custom_call.1}
  #allocation0 [shape = 'u32[]', space=smem, size = 0x4, offset = 0x4, fixed_abs, tag = 'smem constant byte address 0x4 - core index']
  #allocation1 [shape = 'u32[144,128]{1,0:T(1,128)}', space=vmem, size = 0x12000, scoped, tag = 'internal scratch']
  %s0 = inlined_call_operand.hbm [shape: bf16[16,392], index: 0, kind: input, shape index: {}]
  %s1 = inlined_call_operand.hbm [shape: bf16[392,256], index: 1, kind: input, shape index: {}]
  %s2 = inlined_call_operand.vmem [shape: f32[1,256], index: 2, kind: input, shape index: {}]
  %s3 = inlined_call_operand.hbm [shape: bf16[256,128], index: 3, kind: input, shape index: {}]
  %s4 = inlined_call_operand.vmem [shape: f32[1,128], index: 4, kind: input, shape index: {}]
  %s5 = inlined_call_operand.hbm [shape: f32[16,128], index: 5, kind: output, shape index: {}]
  %s6 = sld [smem:[#allocation0]]
  $region42: #{tpu_custom_call.1} parent=0
    _
  %s8 = ssub.s32 1, %s6
  %s9 = scalar_select 0, %s8, %s6
  $region1: #{tpu_custom_call.1} parent=0
    #allocation2 [shape = 'u8[16384]{0}', space=vmem, size = 0x4000, scoped, tag = 'input window, operand 0, single buffered']
    #allocation3 [shape = 's32[1]{0}', space=sflag, size = 0x4, scoped, tag = 'scoped memory for tpu_custom_call.1']
    #allocation4 [shape = 's32[1]{0}', space=sflag, size = 0x4, scoped, tag = 'scoped memory for tpu_custom_call.1']
    #allocation5 [shape = 'u8[200704]{0}', space=vmem, size = 0x31000, scoped, tag = 'input window, operand 1, single buffered']
    #allocation6 [shape = 's32[1]{0}', space=sflag, size = 0x4, scoped, tag = 'scoped memory for tpu_custom_call.1']
    #allocation7 [shape = 'u8[65536]{0}', space=vmem, size = 0x10000, scoped, tag = 'input window, operand 3, single buffered']
    #allocation8 [shape = 'u8[8192]{0}', space=vmem, size = 0x2000, scoped, tag = 'output window, operand 0, single buffered']
    %10 = vsyncpa [#allocation3], 0
    %11 = vsyncpa [#allocation6], 0
    %12 = vsyncpa [#allocation4], 0
    // Predicated region
    $region2: #{tpu_custom_call.1} parent=1 // pred_check
      _
    $region3: #{tpu_custom_call.1} parent=1 // pred_check_branch
      %14 = sbr.rel (0) target = $region5
    $region4: #{tpu_custom_call.1} parent=1 // pred_region
      %s16 = ssub.s32 512, 512
      %17 = vsyncadd [#allocation3], %s16
      %s18 = sshll.u32 [#allocation2], 4
      %s19 = int_to_ptr.vmem [resolvable:$true] %s18
      %24 = dma.hbm_to_vmem [thread:$0]  %s0, 512, %s19, [#allocation3], 256, 256, 16
    $region5: #{tpu_custom_call.1} parent=1 // pred_fallthru
      _
    // Predicated region
    $region6: #{tpu_custom_call.1} parent=1 // pred_check
      _
    $region7: #{tpu_custom_call.1} parent=1 // pred_check_branch
      %26 = sbr.rel (0) target = $region9
    $region8: #{tpu_custom_call.1} parent=1 // pred_region
      %s28 = ssub.s32 6272, 6272
      %29 = vsyncadd [#allocation6], %s28
      %s30 = sshll.u32 [#allocation5], 4
      %s31 = int_to_ptr.vmem [resolvable:$true] %s30
      %36 = dma.hbm_to_vmem [thread:$0]  %s1, 6272, %s31, [#allocation6], 128, 128, 8
    $region9: #{tpu_custom_call.1} parent=1 // pred_fallthru
      _
    // Predicated region
    $region10: #{tpu_custom_call.1} parent=1 // pred_check
      _
    $region11: #{tpu_custom_call.1} parent=1 // pred_check_branch
      %38 = sbr.rel (0) target = $region13
    $region12: #{tpu_custom_call.1} parent=1 // pred_region
      _
    $region13: #{tpu_custom_call.1} parent=1 // pred_fallthru
      _
    // Predicated region
    $region14: #{tpu_custom_call.1} parent=1 // pred_check
      _
    $region15: #{tpu_custom_call.1} parent=1 // pred_check_branch
      %40 = sbr.rel (0) target = $region17
    $region16: #{tpu_custom_call.1} parent=1 // pred_region
      %s42 = ssub.s32 2048, 2048
      %43 = vsyncadd [#allocation6], %s42
      %s44 = sshll.u32 [#allocation7], 4
      %s45 = int_to_ptr.vmem [resolvable:$true] %s44
      %50 = dma.hbm_to_vmem [thread:$0]  %s3, 2048, %s45, [#allocation6], 64, 64, 4
    $region17: #{tpu_custom_call.1} parent=1 // pred_fallthru
      _
    // Predicated region
    $region18: #{tpu_custom_call.1} parent=1 // pred_check
      _
    $region19: #{tpu_custom_call.1} parent=1 // pred_check_branch
      %52 = sbr.rel (0) target = $region21
    $region20: #{tpu_custom_call.1} parent=1 // pred_region
      _
    $region21: #{tpu_custom_call.1} parent=1 // pred_fallthru
      _
    // Predicated region
    $region22: #{tpu_custom_call.1} parent=1 // pred_check
      _
    $region23: #{tpu_custom_call.1} parent=1 // pred_check_branch
      %54 = sbr.rel (0) target = $region25
    $region24: #{tpu_custom_call.1} parent=1 // pred_region
      %55 = dma.done [#allocation3], 512
    $region25: #{tpu_custom_call.1} parent=1 // pred_fallthru
      _
    // Predicated region
    $region26: #{tpu_custom_call.1} parent=1 // pred_check
      _
    $region27: #{tpu_custom_call.1} parent=1 // pred_check_branch
      %57 = sbr.rel (0) target = $region29
    $region28: #{tpu_custom_call.1} parent=1 // pred_region
      %58 = dma.done [#allocation6], 6272
    $region29: #{tpu_custom_call.1} parent=1 // pred_fallthru
      _
    // Predicated region
    $region30: #{tpu_custom_call.1} parent=1 // pred_check
      _
    $region31: #{tpu_custom_call.1} parent=1 // pred_check_branch
      %60 = sbr.rel (0) target = $region33
    $region32: #{tpu_custom_call.1} parent=1 // pred_region
      %61 = dma.done [#allocation6], 2048
    $region33: #{tpu_custom_call.1} parent=1 // pred_fallthru
      _
    %v63 = vld [vmem:[#allocation2] sm:$0xff]
    %v64 = vld [vmem:[#allocation2 + $0x8] sm:$0xff]
    %v65 = vld [vmem:[#allocation2 + $0x10] sm:$0xff]
    %v66 = vld [vmem:[#allocation2 + $0x18] sm:$0xff]
    %v67 = vld [vmem:[#allocation5] sm:$0xff]
    %v68 = vld [vmem:[#allocation5 + $0x8] sm:$0xff]
    %v69 = vld [vmem:[#allocation5 + $0x10] sm:$0xff]
    %v70 = vld [vmem:[#allocation5 + $0x18] sm:$0xff]
    %v71 = vld [vmem:[#allocation5 + $0x20] sm:$0xff]
    %v72 = vld [vmem:[#allocation5 + $0x28] sm:$0xff]
    %v73 = vld [vmem:[#allocation5 + $0x30] sm:$0xff]
    %v74 = vld [vmem:[#allocation5 + $0x38] sm:$0xff]
    %v75 = vld [vmem:[#allocation5 + $0x40] sm:$0xff]
    %v76 = vld [vmem:[#allocation5 + $0x48] sm:$0xff]
    %v77 = vld [vmem:[#allocation5 + $0x50] sm:$0xff]
    %v78 = vld [vmem:[#allocation5 + $0x58] sm:$0xff]
    %v79 = vld [vmem:[#allocation5 + $0x60] sm:$0xff]
    %v80 = vld [vmem:[#allocation5 + $0x68] sm:$0xff]
    %v81 = vld [vmem:[#allocation5 + $0x70] sm:$0xff]
    %v82 = vld [vmem:[#allocation5 + $0x78] sm:$0xff]
    %v83 = vld [vmem:[#allocation5 + $0x80] sm:$0xff]
    %v84 = vld [vmem:[#allocation5 + $0x88] sm:$0xff]
    %v85 = vld [vmem:[#allocation5 + $0x90] sm:$0xff]
    %v86 = vld [vmem:[#allocation5 + $0x98] sm:$0xff]
    %v87 = vld [vmem:[#allocation5 + $0xa0] sm:$0xff]
    %v88 = vld [vmem:[#allocation5 + $0xa8] sm:$0xff]
    %v89 = vld [vmem:[#allocation5 + $0xb0] sm:$0xff]
    %v90 = vld [vmem:[#allocation5 + $0xb8] sm:$0xff]
    %v91 = vld [vmem:[#allocation5 + $0xc0] sm:$0xff]
    %v92 = vld [vmem:[#allocation5 + $0xc8] sm:$0xff]
    %v93 = vld [vmem:[#allocation5 + $0xd0] sm:$0xff]
    %v94 = vld [vmem:[#allocation5 + $0xd8] sm:$0xff]
    %v95 = vld [vmem:[#allocation5 + $0xe0] sm:$0xff]
    %v96 = vld [vmem:[#allocation5 + $0xe8] sm:$0xff]
    %v97 = vld [vmem:[#allocation5 + $0xf0] sm:$0xff]
    %v98 = vld [vmem:[#allocation5 + $0xf8] sm:$0xff]
    %v99 = vld [vmem:[#allocation5 + $0x100] sm:$0xff]
    %v100 = vld [vmem:[#allocation5 + $0x108] sm:$0xff]
    %v101 = vld [vmem:[#allocation5 + $0x110] sm:$0xff]
    %v102 = vld [vmem:[#allocation5 + $0x118] sm:$0xff]
    %v103 = vld [vmem:[#allocation5 + $0x120] sm:$0xff]
    %v104 = vld [vmem:[#allocation5 + $0x128] sm:$0xff]
    %v105 = vld [vmem:[#allocation5 + $0x130] sm:$0xff]
    %v106 = vld [vmem:[#allocation5 + $0x138] sm:$0xff]
    %v107 = vld [vmem:[#allocation5 + $0x140] sm:$0xff]
    %v108 = vld [vmem:[#allocation5 + $0x148] sm:$0xff]
    %v109 = vld [vmem:[#allocation5 + $0x150] sm:$0xff]
    %v110 = vld [vmem:[#allocation5 + $0x158] sm:$0xff]
    %v111 = vld [vmem:[#allocation5 + $0x160] sm:$0xff]
    %v112 = vld [vmem:[#allocation5 + $0x168] sm:$0xff]
    %v113 = vld [vmem:[#allocation5 + $0x170] sm:$0xff]
    %v114 = vld [vmem:[#allocation5 + $0x178] sm:$0xff]
    %v115 = vld [vmem:[#allocation5 + $0x180] sm:$0xff]
    %v116 = vld [vmem:[%s2] sm:$0x3]
    %v118 = vlaneseq
    %v119 = vshrl.u32 %v118, 7
    %v120 = vsub.s32 0, %v119
    %v121 = vrot.slane %v116, %v120
    %v122 = vlaneseq
    %v123 = vshrl.u32 %v122, 7
    %v124 = vsub.s32 1, %v123
    %v125 = vrot.slane %v116, %v124
    %v132 = vunpack.c.l.b16 %v63
    %v133 = vunpack.c.h.b16 %v63
    %v134 = vunpack.c.l.b16 %v64
    %v135 = vunpack.c.h.b16 %v64
    %v136 = vunpack.c.l.b16 %v65
    %v137 = vunpack.c.h.b16 %v65
    %v138 = vunpack.c.l.b16 %v66
    %v139 = vunpack.c.h.b16 %v66
    %v140 = vpack.c.b16 %v136, %v132
    %v141 = vpack.c.b16 %v137, %v133
    %v142 = vpack.c.b16 %v138, %v134
    %v143 = vpack.c.b16 %v139, %v135
    %v196 = vunpack.c.l.b16 %v67
    %v197 = vunpack.c.h.b16 %v67
    %v198 = vunpack.c.l.b16 %v68
    %v199 = vunpack.c.h.b16 %v68
    %v200 = vunpack.c.l.b16 %v69
    %v201 = vunpack.c.h.b16 %v69
    %v202 = vunpack.c.l.b16 %v70
    %v203 = vunpack.c.h.b16 %v70
    %v204 = vunpack.c.l.b16 %v71
    %v205 = vunpack.c.h.b16 %v71
    %v206 = vunpack.c.l.b16 %v72
    %v207 = vunpack.c.h.b16 %v72
    %v208 = vunpack.c.l.b16 %v73
    %v209 = vunpack.c.h.b16 %v73
    %v210 = vunpack.c.l.b16 %v74
    %v211 = vunpack.c.h.b16 %v74
    %v212 = vunpack.c.l.b16 %v75
    %v213 = vunpack.c.h.b16 %v75
    %v214 = vunpack.c.l.b16 %v76
    %v215 = vunpack.c.h.b16 %v76
    %v216 = vunpack.c.l.b16 %v77
    %v217 = vunpack.c.h.b16 %v77
    %v218 = vunpack.c.l.b16 %v78
    %v219 = vunpack.c.h.b16 %v78
    %v220 = vunpack.c.l.b16 %v79
    %v221 = vunpack.c.h.b16 %v79
    %v222 = vunpack.c.l.b16 %v80
    %v223 = vunpack.c.h.b16 %v80
    %v224 = vunpack.c.l.b16 %v81
    %v225 = vunpack.c.h.b16 %v81
    %v226 = vunpack.c.l.b16 %v82
    %v227 = vunpack.c.h.b16 %v82
    %v228 = vunpack.c.l.b16 %v83
    %v229 = vunpack.c.h.b16 %v83
    %v230 = vunpack.c.l.b16 %v84
    %v231 = vunpack.c.h.b16 %v84
    %v232 = vunpack.c.l.b16 %v85
    %v233 = vunpack.c.h.b16 %v85
    %v234 = vunpack.c.l.b16 %v86
    %v235 = vunpack.c.h.b16 %v86
    %v236 = vunpack.c.l.b16 %v87
    %v237 = vunpack.c.h.b16 %v87
    %v238 = vunpack.c.l.b16 %v88
    %v239 = vunpack.c.h.b16 %v88
    %v240 = vunpack.c.l.b16 %v89
    %v241 = vunpack.c.h.b16 %v89
    %v242 = vunpack.c.l.b16 %v90
    %v243 = vunpack.c.h.b16 %v90
    %v244 = vunpack.c.l.b16 %v91
    %v245 = vunpack.c.h.b16 %v91
    %v246 = vunpack.c.l.b16 %v92
    %v247 = vunpack.c.h.b16 %v92
    %v248 = vunpack.c.l.b16 %v93
    %v249 = vunpack.c.h.b16 %v93
    %v250 = vunpack.c.l.b16 %v94
    %v251 = vunpack.c.h.b16 %v94
    %v252 = vunpack.c.l.b16 %v95
    %v253 = vunpack.c.h.b16 %v95
    %v254 = vunpack.c.l.b16 %v96
    %v255 = vunpack.c.h.b16 %v96
    %v256 = vunpack.c.l.b16 %v97
    %v257 = vunpack.c.h.b16 %v97
    %v258 = vunpack.c.l.b16 %v98
    %v259 = vunpack.c.h.b16 %v98
    %v260 = vunpack.c.l.b16 %v99
    %v261 = vunpack.c.h.b16 %v99
    %v262 = vunpack.c.l.b16 %v100
    %v263 = vunpack.c.h.b16 %v100
    %v264 = vunpack.c.l.b16 %v101
    %v265 = vunpack.c.h.b16 %v101
    %v266 = vunpack.c.l.b16 %v102
    %v267 = vunpack.c.h.b16 %v102
    %v268 = vunpack.c.l.b16 %v103
    %v269 = vunpack.c.h.b16 %v103
    %v270 = vunpack.c.l.b16 %v104
    %v271 = vunpack.c.h.b16 %v104
    %v272 = vunpack.c.l.b16 %v105
    %v273 = vunpack.c.h.b16 %v105
    %v274 = vunpack.c.l.b16 %v106
    %v275 = vunpack.c.h.b16 %v106
    %v276 = vunpack.c.l.b16 %v107
    %v277 = vunpack.c.h.b16 %v107
    %v278 = vunpack.c.l.b16 %v108
    %v279 = vunpack.c.h.b16 %v108
    %v280 = vunpack.c.l.b16 %v109
    %v281 = vunpack.c.h.b16 %v109
    %v282 = vunpack.c.l.b16 %v110
    %v283 = vunpack.c.h.b16 %v110
    %v284 = vunpack.c.l.b16 %v111
    %v285 = vunpack.c.h.b16 %v111
    %v286 = vunpack.c.l.b16 %v112
    %v287 = vunpack.c.h.b16 %v112
    %v288 = vunpack.c.l.b16 %v113
    %v289 = vunpack.c.h.b16 %v113
    %v290 = vunpack.c.l.b16 %v114
    %v291 = vunpack.c.h.b16 %v114
    %v292 = vunpack.c.l.b16 %v115
    %v293 = vunpack.c.h.b16 %v115
    %v294 = vpack.c.b16 %v198, %v196
    %v295 = vpack.c.b16 %v199, %v197
    %v296 = vpack.c.b16 %v202, %v200
    %v297 = vpack.c.b16 %v203, %v201
    %v298 = vpack.c.b16 %v206, %v204
    %v299 = vpack.c.b16 %v207, %v205
    %v300 = vpack.c.b16 %v210, %v208
    %v301 = vpack.c.b16 %v211, %v209
    %v302 = vpack.c.b16 %v214, %v212
    %v303 = vpack.c.b16 %v215, %v213
    %v304 = vpack.c.b16 %v218, %v216
    %v305 = vpack.c.b16 %v219, %v217
    %v306 = vpack.c.b16 %v222, %v220
    %v307 = vpack.c.b16 %v223, %v221
    %v308 = vpack.c.b16 %v226, %v224
    %v309 = vpack.c.b16 %v227, %v225
    %v310 = vpack.c.b16 %v230, %v228
    %v311 = vpack.c.b16 %v231, %v229
    %v312 = vpack.c.b16 %v234, %v232
    %v313 = vpack.c.b16 %v235, %v233
    %v314 = vpack.c.b16 %v238, %v236
    %v315 = vpack.c.b16 %v239, %v237
    %v316 = vpack.c.b16 %v242, %v240
    %v317 = vpack.c.b16 %v243, %v241
    %v318 = vpack.c.b16 %v246, %v244
    %v319 = vpack.c.b16 %v247, %v245
    %v320 = vpack.c.b16 %v250, %v248
    %v321 = vpack.c.b16 %v251, %v249
    %v322 = vpack.c.b16 %v254, %v252
    %v323 = vpack.c.b16 %v255, %v253
    %v324 = vpack.c.b16 %v258, %v256
    %v325 = vpack.c.b16 %v259, %v257
    %v326 = vpack.c.b16 %v262, %v260
    %v327 = vpack.c.b16 %v263, %v261
    %v328 = vpack.c.b16 %v266, %v264
    %v329 = vpack.c.b16 %v267, %v265
    %v330 = vpack.c.b16 %v270, %v268
    %v331 = vpack.c.b16 %v271, %v269
    %v332 = vpack.c.b16 %v274, %v272
    %v333 = vpack.c.b16 %v275, %v273
    %v334 = vpack.c.b16 %v278, %v276
    %v335 = vpack.c.b16 %v279, %v277
    %v336 = vpack.c.b16 %v282, %v280
    %v337 = vpack.c.b16 %v283, %v281
    %v338 = vpack.c.b16 %v286, %v284
    %v339 = vpack.c.b16 %v287, %v285
    %v340 = vpack.c.b16 %v290, %v288
    %v341 = vpack.c.b16 %v291, %v289
    %v342 = vpack.c.b16 %v292, %v292
    %v343 = vpack.c.b16 %v293, %v293
    %vm392 = vcmask 64512
    %v394 = vsel %vm392, %v143, 0
    %vm396 = vcmask 1043456
    %v398 = vsel %vm396, %v342, 0
    %v401 = vsel %vm396, %v343, 0
    %403 = vmatprep.subr.bf16.mxu0 %v309
    %404 = vmatpush1.bf16.msra.mxu0 %v308
    %405 = vmatprep.subr.bf16.mxu0 %v307
    %406 = vmatpush1.bf16.msra.mxu0 %v306
    %407 = vmatprep.subr.bf16.mxu0 %v305
    %408 = vmatpush1.bf16.msra.mxu0 %v304
    %409 = vmatprep.subr.bf16.mxu0 %v303
    %410 = vmatpush1.bf16.msra.mxu0 %v302
    %411 = vmatprep.subr.bf16.mxu0 %v301
    %412 = vmatpush1.bf16.msra.mxu0 %v300
    %413 = vmatprep.subr.bf16.mxu0 %v299
    %414 = vmatpush1.bf16.msra.mxu0 %v298
    %415 = vmatprep.subr.bf16.mxu0 %v297
    %416 = vmatpush1.bf16.msra.mxu0 %v296
    %417 = vmatprep.subr.bf16.mxu0 %v295
    %418 = vmatpush1.bf16.msra.mxu0 %v294
    %419 = vmatprep.subr.bf16.mxu0 %v325
    %420 = vmatpush2.bf16.msra.mxu0 %v324
    %421 = vmatprep.subr.bf16.mxu0 %v323
    %422 = vmatpush2.bf16.msra.mxu0 %v322
    %423 = vmatprep.subr.bf16.mxu0 %v321
    %424 = vmatpush2.bf16.msra.mxu0 %v320
    %425 = vmatprep.subr.bf16.mxu0 %v319
    %426 = vmatpush2.bf16.msra.mxu0 %v318
    %427 = vmatprep.subr.bf16.mxu0 %v317
    %428 = vmatpush2.bf16.msra.mxu0 %v316
    %429 = vmatprep.subr.bf16.mxu0 %v315
    %430 = vmatpush2.bf16.msra.mxu0 %v314
    %431 = vmatprep.subr.bf16.mxu0 %v313
    %432 = vmatpush2.bf16.msra.mxu0 %v312
    %433 = vmatprep.subr.bf16.mxu0 %v311
    %434 = vmatpush2.bf16.msra.mxu0 %v310
    %435 = vmatprep.mubr.bf16.mxu0 %v141
    %436 = vmatmul.mubr.bf16.gmra.mxu0 %v140
    %v437 = vpop.f32.mrf.mxu0
    %v438 = vadd.f32 %v121, %v437
    %v439 = vpop.f32.mrf.mxu0
    %v440 = vadd.f32 %v125, %v439
    %v441 = vpop.f32.mrf.mxu0
    %v442 = vadd.f32 %v121, %v441
    %v443 = vpop.f32.mrf.mxu0
    %v444 = vadd.f32 %v125, %v443
    %445 = vdwg.mxu0
    %446 = vmatprep.subr.bf16.mxu0 %v341
    %447 = vmatpush1.bf16.msra.mxu0 %v340
    %448 = vmatprep.subr.bf16.mxu0 %v339
    %449 = vmatpush1.bf16.msra.mxu0 %v338
    %450 = vmatprep.subr.bf16.mxu0 %v337
    %451 = vmatpush1.bf16.msra.mxu0 %v336
    %452 = vmatprep.subr.bf16.mxu0 %v335
    %453 = vmatpush1.bf16.msra.mxu0 %v334
    %454 = vmatprep.subr.bf16.mxu0 %v333
    %455 = vmatpush1.bf16.msra.mxu0 %v332
    %456 = vmatprep.subr.bf16.mxu0 %v331
    %457 = vmatpush1.bf16.msra.mxu0 %v330
    %458 = vmatprep.subr.bf16.mxu0 %v329
    %459 = vmatpush1.bf16.msra.mxu0 %v328
    %460 = vmatprep.subr.bf16.mxu0 %v327
    %461 = vmatpush1.bf16.msra.mxu0 %v326
    %462 = vmatprep.subr.bf16.mxu0 0
    %463 = vmatpush2.bf16.msra.mxu0 0
    %464 = vmatprep.subr.bf16.mxu0 0
    %465 = vmatpush2.bf16.msra.mxu0 0
    %466 = vmatprep.subr.bf16.mxu0 0
    %467 = vmatpush2.bf16.msra.mxu0 0
    %468 = vmatprep.subr.bf16.mxu0 0
    %469 = vmatpush2.bf16.msra.mxu0 0
    %470 = vmatprep.subr.bf16.mxu0 0
    %471 = vmatpush2.bf16.msra.mxu0 0
    %472 = vmatprep.subr.bf16.mxu0 0
    %473 = vmatpush2.bf16.msra.mxu0 0
    %474 = vmatprep.subr.bf16.mxu0 0
    %475 = vmatpush2.bf16.msra.mxu0 0
    %476 = vmatprep.subr.bf16.mxu0 %v401
    %477 = vmatpush2.bf16.msra.mxu0 %v398
    %478 = vmatprep.mubr.bf16.mxu0 %v394
    %479 = vmatmul.mubr.bf16.gmra.mxu0 %v142
    %v480 = vpop.f32.mrf.mxu0
    %v481 = vadd.f32 %v438, %v480
    %v482 = vpop.f32.mrf.mxu0
    %v483 = vadd.f32 %v440, %v482
    %v484 = vpop.f32.mrf.mxu0
    %v485 = vadd.f32 %v442, %v484
    %v486 = vpop.f32.mrf.mxu0
    %v487 = vadd.f32 %v444, %v486
    %488 = vdwg.mxu0
    %v489 = vmax.f32 %v481, 0.0
    %v490 = vmax.f32 %v483, 0.0
    %v491 = vmax.f32 %v485, 0.0
    %v492 = vmax.f32 %v487, 0.0
    %v493 = vpack.c.bf16 %v491, %v489
    %v494 = vpack.c.bf16 %v492, %v490
    %v495 = vld [vmem:[#allocation7] sm:$0xf]
    %v496 = vld [vmem:[#allocation7 + $0x4] sm:$0xf]
    %v497 = vld [vmem:[#allocation7 + $0x8] sm:$0xf]
    %v498 = vld [vmem:[#allocation7 + $0xc] sm:$0xf]
    %v499 = vld [vmem:[#allocation7 + $0x10] sm:$0xf]
    %v500 = vld [vmem:[#allocation7 + $0x14] sm:$0xf]
    %v501 = vld [vmem:[#allocation7 + $0x18] sm:$0xf]
    %v502 = vld [vmem:[#allocation7 + $0x1c] sm:$0xf]
    %v503 = vld [vmem:[#allocation7 + $0x20] sm:$0xf]
    %v504 = vld [vmem:[#allocation7 + $0x24] sm:$0xf]
    %v505 = vld [vmem:[#allocation7 + $0x28] sm:$0xf]
    %v506 = vld [vmem:[#allocation7 + $0x2c] sm:$0xf]
    %v507 = vld [vmem:[#allocation7 + $0x30] sm:$0xf]
    %v508 = vld [vmem:[#allocation7 + $0x34] sm:$0xf]
    %v509 = vld [vmem:[#allocation7 + $0x38] sm:$0xf]
    %v510 = vld [vmem:[#allocation7 + $0x3c] sm:$0xf]
    %v511 = vld [vmem:[#allocation7 + $0x40] sm:$0xf]
    %v512 = vld [vmem:[#allocation7 + $0x44] sm:$0xf]
    %v513 = vld [vmem:[#allocation7 + $0x48] sm:$0xf]
    %v514 = vld [vmem:[#allocation7 + $0x4c] sm:$0xf]
    %v515 = vld [vmem:[#allocation7 + $0x50] sm:$0xf]
    %v516 = vld [vmem:[#allocation7 + $0x54] sm:$0xf]
    %v517 = vld [vmem:[#allocation7 + $0x58] sm:$0xf]
    %v518 = vld [vmem:[#allocation7 + $0x5c] sm:$0xf]
    %v519 = vld [vmem:[#allocation7 + $0x60] sm:$0xf]
    %v520 = vld [vmem:[#allocation7 + $0x64] sm:$0xf]
    %v521 = vld [vmem:[#allocation7 + $0x68] sm:$0xf]
    %v522 = vld [vmem:[#allocation7 + $0x6c] sm:$0xf]
    %v523 = vld [vmem:[#allocation7 + $0x70] sm:$0xf]
    %v524 = vld [vmem:[#allocation7 + $0x74] sm:$0xf]
    %v525 = vld [vmem:[#allocation7 + $0x78] sm:$0xf]
    %v526 = vld [vmem:[#allocation7 + $0x7c] sm:$0xf]
    %v527 = vld [vmem:[%s4] sm:$0x1]
    %v529 = vlaneseq
    %v530 = vshrl.u32 %v529, 7
    %v531 = vsub.s32 0, %v530
    %v532 = vrot.slane %v527, %v531
    %v566 = vunpack.c.l.b16 %v495
    %v567 = vunpack.c.l.b16 %v496
    %v568 = vunpack.c.l.b16 %v497
    %v569 = vunpack.c.l.b16 %v498
    %v570 = vunpack.c.l.b16 %v499
    %v571 = vunpack.c.l.b16 %v500
    %v572 = vunpack.c.l.b16 %v501
    %v573 = vunpack.c.l.b16 %v502
    %v574 = vunpack.c.l.b16 %v503
    %v575 = vunpack.c.l.b16 %v504
    %v576 = vunpack.c.l.b16 %v505
    %v577 = vunpack.c.l.b16 %v506
    %v578 = vunpack.c.l.b16 %v507
    %v579 = vunpack.c.l.b16 %v508
    %v580 = vunpack.c.l.b16 %v509
    %v581 = vunpack.c.l.b16 %v510
    %v582 = vunpack.c.l.b16 %v511
    %v583 = vunpack.c.l.b16 %v512
    %v584 = vunpack.c.l.b16 %v513
    %v585 = vunpack.c.l.b16 %v514
    %v586 = vunpack.c.l.b16 %v515
    %v587 = vunpack.c.l.b16 %v516
    %v588 = vunpack.c.l.b16 %v517
    %v589 = vunpack.c.l.b16 %v518
    %v590 = vunpack.c.l.b16 %v519
    %v591 = vunpack.c.l.b16 %v520
    %v592 = vunpack.c.l.b16 %v521
    %v593 = vunpack.c.l.b16 %v522
    %v594 = vunpack.c.l.b16 %v523
    %v595 = vunpack.c.l.b16 %v524
    %v596 = vunpack.c.l.b16 %v525
    %v597 = vunpack.c.l.b16 %v526
    %v598 = vpack.c.b16 %v567, %v566
    %v599 = vpack.c.b16 %v569, %v568
    %v600 = vpack.c.b16 %v571, %v570
    %v601 = vpack.c.b16 %v573, %v572
    %v602 = vpack.c.b16 %v575, %v574
    %v603 = vpack.c.b16 %v577, %v576
    %v604 = vpack.c.b16 %v579, %v578
    %v605 = vpack.c.b16 %v581, %v580
    %v606 = vpack.c.b16 %v583, %v582
    %v607 = vpack.c.b16 %v585, %v584
    %v608 = vpack.c.b16 %v587, %v586
    %v609 = vpack.c.b16 %v589, %v588
    %v610 = vpack.c.b16 %v591, %v590
    %v611 = vpack.c.b16 %v593, %v592
    %v612 = vpack.c.b16 %v595, %v594
    %v613 = vpack.c.b16 %v597, %v596
    %630 = vmatprep.subr.bf16.mxu0 0
    %631 = vmatpush1.bf16.msra.mxu0 %v605
    %632 = vmatprep.subr.bf16.mxu0 0
    %633 = vmatpush1.bf16.msra.mxu0 %v604
    %634 = vmatprep.subr.bf16.mxu0 0
    %635 = vmatpush1.bf16.msra.mxu0 %v603
    %636 = vmatprep.subr.bf16.mxu0 0
    %637 = vmatpush1.bf16.msra.mxu0 %v602
    %638 = vmatprep.subr.bf16.mxu0 0
    %639 = vmatpush1.bf16.msra.mxu0 %v601
    %640 = vmatprep.subr.bf16.mxu0 0
    %641 = vmatpush1.bf16.msra.mxu0 %v600
    %642 = vmatprep.subr.bf16.mxu0 0
    %643 = vmatpush1.bf16.msra.mxu0 %v599
    %644 = vmatprep.subr.bf16.mxu0 0
    %645 = vmatpush1.bf16.msra.mxu0 %v598
    %646 = vmatprep.subr.bf16.mxu0 0
    %647 = vmatpush2.bf16.msra.mxu0 %v613
    %648 = vmatprep.subr.bf16.mxu0 0
    %649 = vmatpush2.bf16.msra.mxu0 %v612
    %650 = vmatprep.subr.bf16.mxu0 0
    %651 = vmatpush2.bf16.msra.mxu0 %v611
    %652 = vmatprep.subr.bf16.mxu0 0
    %653 = vmatpush2.bf16.msra.mxu0 %v610
    %654 = vmatprep.subr.bf16.mxu0 0
    %655 = vmatpush2.bf16.msra.mxu0 %v609
    %656 = vmatprep.subr.bf16.mxu0 0
    %657 = vmatpush2.bf16.msra.mxu0 %v608
    %658 = vmatprep.subr.bf16.mxu0 0
    %659 = vmatpush2.bf16.msra.mxu0 %v607
    %660 = vmatprep.subr.bf16.mxu0 0
    %661 = vmatpush2.bf16.msra.mxu0 %v606
    %662 = vmatprep.mubr.bf16.mxu0 %v494
    %663 = vmatmul.mubr.bf16.gmra.mxu0 %v493
    %v664 = vpop.f32.mrf.mxu0
    %v665 = vadd.f32 %v532, %v664
    %v666 = vpop.f32.mrf.mxu0
    %v667 = vpop.f32.mrf.mxu0
    %v668 = vadd.f32 %v532, %v667
    %v669 = vpop.f32.mrf.mxu0
    %670 = vdwg.mxu0
    %671 = vst [vmem:[#allocation8] sm:$0xff] %v665
    %672 = vst [vmem:[#allocation8 + $0x8] sm:$0xff] %v668
    // Predicated region
    $region34: #{tpu_custom_call.1} parent=1 // pred_check
      _
    $region35: #{tpu_custom_call.1} parent=1 // pred_check_branch
      %674 = sbr.rel (0) target = $region37
    $region36: #{tpu_custom_call.1} parent=1 // pred_region
      %s676 = ssub.s32 256, 256
      %677 = vsyncadd [#allocation4], %s676
      %s678 = sshll.u32 [#allocation8], 4
      %s679 = int_to_ptr.vmem [resolvable:$true] %s678
      %684 = dma.vmem_to_hbm [thread:$0]  %s679, 256, %s5, [#allocation4], 128, 128, 8
    $region37: #{tpu_custom_call.1} parent=1 // pred_fallthru
      _
    // Predicated region
    $region38: #{tpu_custom_call.1} parent=1 // pred_check
      _
    $region39: #{tpu_custom_call.1} parent=1 // pred_check_branch
      %686 = sbr.rel (0) target = $region41
    $region40: #{tpu_custom_call.1} parent=1 // pred_region
      %687 = dma.done [#allocation4], 256
    $region41: #{tpu_custom_call.1} parent=1 // pred_fallthru
      _
    %688 = vsyncpa [#allocation3], 1
    %689 = vsyncpa [#allocation6], 1
    %690 = vsyncpa [#allocation4], 1

</llo_original>
